<compile_context>
chip_gen: v5e
topology: v5e:2x2
jax: 0.10.0
libtpu: 0.0.40
codegen_flags: <defaults>
</compile_context>

<pallas_src>
import functools

import jax
import jax.numpy as jnp
from jax.experimental import pallas as pl
from jax.experimental.pallas import tpu as pltpu


# ---------------------------------------------------------------------------
# Fused LDAM + cross-entropy kernel.
#   x_ref   : [tb, C]  float32 logits tile
#   tgt_ref : [tb, 1]  int32 targets tile
#   m_ref   : [1,  C]  float32 per-class margins (resident across the grid)
#   loss_ref: [1,  1]  float32 accumulator (mean loss over the full batch)
# ---------------------------------------------------------------------------
def _ldam_ce_kernel(x_ref, tgt_ref, m_ref, loss_ref, *, s, batch_total):
    @pl.when(pl.program_id(0) == 0)
    def _():
        loss_ref[...] = jnp.zeros_like(loss_ref)

    x = x_ref[...].astype(jnp.float32)          # [tb, C]
    tgt = tgt_ref[...]                          # [tb, 1] int32
    m = m_ref[...].astype(jnp.float32)          # [1, C]

    tb, c = x.shape
    col = jax.lax.broadcasted_iota(jnp.int32, (tb, c), 1)
    onehot = col == tgt                         # [tb, C] bool (== F.one_hot)

    # batch_m[b] = m_list[target[b]]  -- VPU masked reduce instead of the
    # 1-wide MXU matmul `m_list @ one_hot.T` in the PyTorch code.
    batch_m = jnp.sum(jnp.where(onehot, m, 0.0), axis=1, keepdims=True)   # [tb,1]

    # output = where(index, x - batch_m, x); logits = s * output
    logits = jnp.where(onehot, x - batch_m, x) * s                        # [tb,C]

    # numerically stable cross entropy, averaged over the FULL batch
    row_max = jnp.max(logits, axis=1, keepdims=True)
    lse = row_max + jnp.log(
        jnp.sum(jnp.exp(logits - row_max), axis=1, keepdims=True)
    )                                                                      # [tb,1]
    tgt_logit = jnp.sum(jnp.where(onehot, logits, 0.0), axis=1, keepdims=True)
    per_row = lse - tgt_logit                                              # [tb,1]

    loss_ref[...] += jnp.sum(per_row, keepdims=True) * (1.0 / batch_total)


def _pick_batch_tile(batch):
    if batch % 8 != 0:
        return batch
    for cand in (512, 256, 128, 64, 32, 16, 8):
        if batch % cand == 0:
            return min(cand, batch)
    return batch


def ldam_cross_entropy(x, target, m_list, *, s=1.0, block_b=None):
    """Pallas LDAM loss.  x: [B, C] logits, target: [B] int, m_list: [C]."""
    B, C = x.shape
    if block_b is None:
        block_b = _pick_batch_tile(B)
    if B % block_b != 0:
        block_b = B
    grid = (B // block_b,)

    x_f32 = x.astype(jnp.float32)
    tgt_2d = target.astype(jnp.int32).reshape(B, 1)
    m_2d = m_list.astype(jnp.float32).reshape(1, C)

    kernel = functools.partial(
        _ldam_ce_kernel, s=float(s), batch_total=float(B)
    )
    loss = pl.pallas_call(
        kernel,
        out_shape=jax.ShapeDtypeStruct((1, 1), jnp.float32),
        grid_spec=pltpu.PrefetchScalarGridSpec(
            num_scalar_prefetch=0,
            grid=grid,
            in_specs=[
                pl.BlockSpec((block_b, C), lambda i: (i, 0)),   # logits tile
                pl.BlockSpec((block_b, 1), lambda i: (i, 0)),   # targets tile
                pl.BlockSpec((1, C), lambda i: (0, 0)),         # margins (resident)
            ],
            out_specs=pl.BlockSpec((1, 1), lambda i: (0, 0)),   # scalar accumulator
        ),
        compiler_params=pltpu.CompilerParams(
            dimension_semantics=("arbitrary",),   # reduction over batch tiles
        ),
    )(x_f32, tgt_2d, m_2d)
    return loss[0, 0]


# ---------------------------------------------------------------------------
# Module-like wrapper mirroring the PyTorch LDAMLoss constructor.
# ---------------------------------------------------------------------------
class LDAMLossPallas:
    def __init__(self, class_num_list, Constant=0.5, s=1):
        cnl = jnp.asarray(class_num_list, jnp.float32)
        # m_list = Constant / sqrt(sqrt(class_num_list))
        self.m_list = (1.0 / jnp.sqrt(jnp.sqrt(cnl))) * Constant
        self.s = float(s)
        self.num_classes = int(cnl.shape[0])
        # TODO(synk): `.to(rank)` / torch.cuda.FloatTensor are device-placement
        # details with no Pallas analogue; JAX default device placement is used.
        self._fn = jax.jit(
            functools.partial(ldam_cross_entropy, s=self.s)
        )

    def __call__(self, x, target):
        return self._fn(x, target, self.m_list)


# ---------------------------------------------------------------------------
# Pure-JAX reference for a correctness sanity check.
# ---------------------------------------------------------------------------
def _reference_ldam(x, target, m_list, s):
    C = m_list.shape[-1]
    onehot = jax.nn.one_hot(target, C, dtype=jnp.float32)
    batch_m = (onehot * m_list.reshape(1, -1)).sum(axis=1, keepdims=True)
    out = jnp.where(onehot > 0, x - batch_m, x) * s
    logp = jax.nn.log_softmax(out, axis=1)
    return (-(onehot * logp).sum(axis=1)).mean()


# ---------------------------------------------------------------------------
if __name__ == "__main__":
    key = jax.random.PRNGKey(0)
    k_x, k_t = jax.random.split(key)

    CLASS_NUM_LIST = [50, 30, 20, 10, 5]   # imbalanced class counts -> margins
    NUM_CLASSES = len(CLASS_NUM_LIST)
    BATCH = 8

    loss_mod = LDAMLossPallas(CLASS_NUM_LIST, Constant=0.5, s=1)

    x = jax.random.normal(k_x, (BATCH, NUM_CLASSES), jnp.float32)
    target = jax.random.randint(k_t, (BATCH,), 0, NUM_CLASSES, jnp.int32)

    loss = loss_mod(x, target)
    jax.block_until_ready(loss)

    ref = _reference_ldam(x, target, loss_mod.m_list, loss_mod.s)
    assert loss.shape == ()
    assert bool(jnp.isfinite(loss))
    assert bool(jnp.allclose(loss, ref, rtol=1e-4, atol=1e-4)), (loss, ref)
    print("KERNEL_OK")
</pallas_src>

<mosaic_0001>
module attributes {stable_mosaic.version = 11 : i64} {
  func.func @_ldam_ce_kernel(%arg0: i32, %arg1: memref<8x5xf32, #tpu.memory_space<vmem>>, %arg2: memref<8x1xi32, #tpu.memory_space<vmem>>, %arg3: memref<1x5xf32, #tpu.memory_space<vmem>>, %arg4: memref<1x1xf32, #tpu.memory_space<vmem>>) attributes {dimension_semantics = [#tpu.dimension_semantics<arbitrary>], iteration_bounds = array<i64: 1>, scalar_prefetch = 0 : i64, scratch_operands = 0 : i64, tpu.core_type = #tpu.core_type<tc>, window_params = [{transform_indices = @transform_0, window_bounds = array<i64: 8, 5>}, {transform_indices = @transform_1, window_bounds = array<i64: 8, 1>}, {pipeline_mode = #tpu.pipeline_mode<synchronous>, transform_indices = @transform_2, window_bounds = array<i64: 1, 5>}, {pipeline_mode = #tpu.pipeline_mode<synchronous>, transform_indices = @transform_3, window_bounds = array<i64: 1, 1>}]} {
    %c0_i32 = arith.constant 0 : i32
    %0 = arith.cmpi eq, %arg0, %c0_i32 : i32
    %1 = arith.extui %0 : i1 to i32
    %c0_i32_0 = arith.constant 0 : i32
    %2 = arith.cmpi ne, %1, %c0_i32_0 : i32
    scf.if %2 {
      %cst_18 = arith.constant 0.000000e+00 : f32
      %44 = vector.broadcast %cst_18 : f32 to vector<1x1xf32>
      %c0_19 = arith.constant 0 : index
      %c0_20 = arith.constant 0 : index
      %45 = vector.load %arg4[%c0_19, %c0_20] : memref<1x1xf32, #tpu.memory_space<vmem>>, vector<1x1xf32>
      tpu.vector_store %arg4[%c0_19, %c0_20], %44 {strides = array<i32>} : memref<1x1xf32, #tpu.memory_space<vmem>>, vector<1x1xf32>,
    } else {
    }
    %c0 = arith.constant 0 : index
    %c0_1 = arith.constant 0 : index
    %3 = vector.load %arg1[%c0, %c0_1] : memref<8x5xf32, #tpu.memory_space<vmem>>, vector<8x5xf32>
    %c0_2 = arith.constant 0 : index
    %c0_3 = arith.constant 0 : index
    %4 = vector.load %arg2[%c0_2, %c0_3] : memref<8x1xi32, #tpu.memory_space<vmem>>, vector<8x1xi32>
    %c0_4 = arith.constant 0 : index
    %c0_5 = arith.constant 0 : index
    %5 = vector.load %arg3[%c0_4, %c0_5] : memref<1x5xf32, #tpu.memory_space<vmem>>, vector<1x5xf32>
    %6 = tpu.iota {dimensions = array<i32: 1>} : vector<8x5xi32>
    %7 = vector.broadcast %4 : vector<8x1xi32> to vector<8x5xi32>
    %8 = arith.cmpi eq, %6, %7 : vector<8x5xi32>
    %cst = arith.constant 0.000000e+00 : f32
    %9 = vector.shape_cast %5 : vector<1x5xf32> to vector<1x5xf32>
    %10 = vector.broadcast %9 : vector<1x5xf32> to vector<8x5xf32>
    %11 = vector.broadcast %cst : f32 to vector<8x5xf32>
    %12 = arith.select %8, %10, %11 : vector<8x5xi1>, vector<8x5xf32>
    %cst_6 = arith.constant dense<0.000000e+00> : vector<8xf32>
    %13 = vector.multi_reduction <add>, %12, %cst_6 [1] : vector<8x5xf32> to vector<8xf32>
    %14 = vector.shape_cast %13 : vector<8xf32> to vector<8x1xf32>
    %15 = vector.broadcast %14 : vector<8x1xf32> to vector<8x5xf32>
    %16 = arith.subf %3, %15 : vector<8x5xf32>
    %17 = arith.select %8, %16, %3 : vector<8x5xi1>, vector<8x5xf32>
    %cst_7 = arith.constant 1.000000e+00 : f32
    %18 = vector.broadcast %cst_7 : f32 to vector<8x5xf32>
    %19 = arith.mulf %17, %18 : vector<8x5xf32>
    %cst_8 = arith.constant dense<0xFF800000> : vector<8xf32>
    %20 = vector.multi_reduction <maximumf>, %19, %cst_8 [1] : vector<8x5xf32> to vector<8xf32>
    %21 = vector.shape_cast %20 : vector<8xf32> to vector<8x1xf32>
    %22 = vector.broadcast %21 : vector<8x1xf32> to vector<8x5xf32>
    %23 = arith.subf %19, %22 : vector<8x5xf32>
    %24 = math.exp %23 : vector<8x5xf32>
    %cst_9 = arith.constant dense<0.000000e+00> : vector<8xf32>
    %25 = vector.multi_reduction <add>, %24, %cst_9 [1] : vector<8x5xf32> to vector<8xf32>
    %26 = vector.shape_cast %25 : vector<8xf32> to vector<8x1xf32>
    %27 = math.log %26 : vector<8x1xf32>
    %28 = arith.addf %21, %27 : vector<8x1xf32>
    %cst_10 = arith.constant 0.000000e+00 : f32
    %29 = vector.broadcast %cst_10 : f32 to vector<8x5xf32>
    %30 = arith.select %8, %19, %29 : vector<8x5xi1>, vector<8x5xf32>
    %cst_11 = arith.constant dense<0.000000e+00> : vector<8xf32>
    %31 = vector.multi_reduction <add>, %30, %cst_11 [1] : vector<8x5xf32> to vector<8xf32>
    %32 = vector.shape_cast %31 : vector<8xf32> to vector<8x1xf32>
    %33 = arith.subf %28, %32 : vector<8x1xf32>
    %c0_12 = arith.constant 0 : index
    %c0_13 = arith.constant 0 : index
    %34 = vector.load %arg4[%c0_12, %c0_13] : memref<1x1xf32, #tpu.memory_space<vmem>>, vector<1x1xf32>
    %35 = vector.shape_cast %33 : vector<8x1xf32> to vector<1x8x1xf32>
    %cst_14 = arith.constant dense<0.000000e+00> : vector<1xf32>
    %36 = vector.multi_reduction <add>, %35, %cst_14 [1, 2] : vector<1x8x1xf32> to vector<1xf32>
    %37 = vector.shape_cast %36 : vector<1xf32> to vector<1x1x1xf32>
    %38 = vector.extract %37[0, 0, 0] : f32 from vector<1x1x1xf32>
    %39 = vector.broadcast %38 : f32 to vector<1x1xf32>
    %cst_15 = arith.constant 1.250000e-01 : f32
    %40 = vector.broadcast %cst_15 : f32 to vector<1x1xf32>
    %41 = arith.mulf %39, %40 : vector<1x1xf32>
    %42 = arith.addf %34, %41 : vector<1x1xf32>
    %c0_16 = arith.constant 0 : index
    %c0_17 = arith.constant 0 : index
    %43 = vector.load %arg4[%c0_16, %c0_17] : memref<1x1xf32, #tpu.memory_space<vmem>>, vector<1x1xf32>
    tpu.vector_store %arg4[%c0_16, %c0_17], %42 {strides = array<i32>} : memref<1x1xf32, #tpu.memory_space<vmem>>, vector<1x1xf32>,
    return
  }
  func.func @transform_0(%arg0: i32) -> (i32, i32) {
    %c0_i32 = arith.constant 0 : i32
    %c0_i32_0 = arith.constant 0 : i32
    return %arg0, %c0_i32 : i32, i32
  }
  func.func @transform_1(%arg0: i32) -> (i32, i32) {
    %c0_i32 = arith.constant 0 : i32
    %c0_i32_0 = arith.constant 0 : i32
    return %arg0, %c0_i32 : i32, i32
  }
  func.func @transform_2(%arg0: i32) -> (i32, i32) {
    %c0_i32 = arith.constant 0 : i32
    %c0_i32_0 = arith.constant 0 : i32
    %c0_i32_1 = arith.constant 0 : i32
    return %c0_i32, %c0_i32_0 : i32, i32
  }
  func.func @transform_3(%arg0: i32) -> (i32, i32) {
    %c0_i32 = arith.constant 0 : i32
    %c0_i32_0 = arith.constant 0 : i32
    %c0_i32_1 = arith.constant 0 : i32
    return %c0_i32, %c0_i32_0 : i32, i32
  }
}

</mosaic_0001>

<llo_original>
// kernel: ldam_cross_entropy.1
$region0: #{ldam_cross_entropy.1}
  #allocation0 [shape = 'u32[]', space=smem, size = 0x4, offset = 0x4, fixed_abs, tag = 'smem constant byte address 0x4 - core index']
  #allocation1 [shape = 'u32[72,128]{1,0:T(1,128)}', space=vmem, size = 0x9000, scoped, tag = 'internal scratch']
  %s0 = inlined_call_operand.vmem [shape: f32[8,5], index: 0, kind: input, shape index: {}]
  %s1 = inlined_call_operand.vmem [shape: s32[8,1], index: 1, kind: input, shape index: {}]
  %s2 = inlined_call_operand.vmem [shape: f32[1,5], index: 2, kind: input, shape index: {}]
  %s3 = inlined_call_operand.hbm [shape: f32[1,1], index: 3, kind: output, shape index: {}]
  %s4 = sld [smem:[#allocation0]]
  $region26: #{ldam_cross_entropy.1} parent=0
    _
  %s6 = ssub.s32 1, %s4
  %s7 = scalar_select 0, %s6, %s4
  $region1: #{ldam_cross_entropy.1} parent=0
    #allocation2 [shape = 'u8[512]{0}', space=vmem, size = 0x400, scoped, tag = 'output window, operand 0, single buffered']
    #allocation3 [shape = 's32[1]{0}', space=sflag, size = 0x4, scoped, tag = 'scoped memory for ldam_cross_entropy.1']
    %8 = vsyncpa [#allocation3], 0
    // Predicated region
    $region2: #{ldam_cross_entropy.1} parent=1 // pred_check
      _
    $region3: #{ldam_cross_entropy.1} parent=1 // pred_check_branch
      %10 = sbr.rel (0) target = $region5
    $region4: #{ldam_cross_entropy.1} parent=1 // pred_region
      _
    $region5: #{ldam_cross_entropy.1} parent=1 // pred_fallthru
      _
    // Predicated region
    $region6: #{ldam_cross_entropy.1} parent=1 // pred_check
      _
    $region7: #{ldam_cross_entropy.1} parent=1 // pred_check_branch
      %12 = sbr.rel (0) target = $region9
    $region8: #{ldam_cross_entropy.1} parent=1 // pred_region
      _
    $region9: #{ldam_cross_entropy.1} parent=1 // pred_fallthru
      _
    // Predicated region
    $region10: #{ldam_cross_entropy.1} parent=1 // pred_check
      _
    $region11: #{ldam_cross_entropy.1} parent=1 // pred_check_branch
      %14 = sbr.rel (0) target = $region13
    $region12: #{ldam_cross_entropy.1} parent=1 // pred_region
      _
    $region13: #{ldam_cross_entropy.1} parent=1 // pred_fallthru
      _
    %p15 = scmp.eq.s32.totalorder 0, 0
    // Predicated region
    $region14: #{ldam_cross_entropy.1} parent=1 // pred_check
      %p16 = pneg %p15
    $region15: #{ldam_cross_entropy.1} parent=1 // pred_check_branch
      %18 = sbr.rel (%p16) target = $region17
    $region16: #{ldam_cross_entropy.1} parent=1 // pred_region
      %vm19 = vcmask 0
      %20 = vst.msk [vmem:[#allocation2] sm:$0x1] %vm19, 0.0
    $region17: #{ldam_cross_entropy.1} parent=1 // pred_fallthru
      _
    %v21 = vld [vmem:[%s0] sm:$0xff]
    %v22 = vld [vmem:[%s1] sm:$0xff]
    %v23 = vld [vmem:[%s2] sm:$0x1]
    %v24 = vlaneseq
    %v25 = vand.u32 %v24, 127
    %26 = vset.pattern.permute.xlu0 0
    %27 = vperm.xlu0 %26, %v22
    %v28 = vpop.permute.xlu0 %27
    %vm29 = vcmp.eq.s32.totalorder %v25, %v28
    %v31 = vperm.slane %v23, 0
    %v33 = vsel %vm29, %v31, 0.0
    %vm34 = vcmask 39936
    %v35 = vsel %vm34, %v33, 0.0
    %36 = vadd.xlane.f32.xlu0 %v35
    %v37 = vpop.xlane.xlu0 %36
    %v38 = vsub.f32 %v21, %v37
    %v39 = vsel %vm29, %v38, %v21
    %v40 = vsel %vm34, %v39, -inf
    %41 = vmax.xlane.f32.xlu0 %v40
    %v42 = vpop.xlane.xlu0 %41
    %v43 = vsub.f32 %v39, %v42
    %v44 = vmul.f32 %v43, 1.442695
    %v45 = vpow.pop %v44
    %v46 = vsel %vm34, %v45, 0.0
    %47 = vadd.xlane.f32.xlu0 %v46
    %v48 = vpop.xlane.xlu0 %47
    %v49 = vlog2.pop %v48
    %v50 = vmul.f32 %v49, 0.6931472
    %v51 = vadd.f32 %v42, %v50
    %v52 = vsel %vm29, %v38, 0.0
    %v53 = vsel %vm34, %v52, 0.0
    %54 = vadd.xlane.f32.xlu0 %v53
    %v55 = vpop.xlane.xlu0 %54
    %v56 = vsub.f32 %v51, %v55
    %v57 = vld [vmem:[#allocation2] sm:$0x1]
    %vm58 = vcmask 7168
    %v59 = vsel %vm58, %v56, 0.0
    %60 = vadd.xlane.f32.xlu0 %v59
    %v61 = vpop.xlane.xlu0 %60
    %v62 = vrot.slane %v61, 4
    %v63 = vadd.f32 %v61, %v62
    %v64 = vrot.slane %v63, 2
    %v65 = vadd.f32 %v63, %v64
    %v66 = vrot.slane %v65, 1
    %v67 = vadd.f32 %v65, %v66
    %s68 = vtos %v67
    %v69 = vstv %s68
    %v70 = vmul.f32 %v69, 0.125
    %v71 = vadd.f32 %v57, %v70
    %vm72 = vcmask 0
    %73 = vst.msk [vmem:[#allocation2] sm:$0x1] %vm72, %v71
    // Predicated region
    $region18: #{ldam_cross_entropy.1} parent=1 // pred_check
      _
    $region19: #{ldam_cross_entropy.1} parent=1 // pred_check_branch
      %75 = sbr.rel (0) target = $region21
    $region20: #{ldam_cross_entropy.1} parent=1 // pred_region
      %77 = vsyncadd [#allocation3], 0
      %s79 = sshll.u32 [#allocation2], 4
      %s80 = int_to_ptr.vmem [resolvable:$true] %s79
      %s81 = sshll.u32 %s3, 4
      %s82 = int_to_ptr.hbm [resolvable:$true] %s81
      %84 = dma.vmem_to_hbm [thread:$0]  %s80, 16, %s82, [#allocation3]
    $region21: #{ldam_cross_entropy.1} parent=1 // pred_fallthru
      _
    // Predicated region
    $region22: #{ldam_cross_entropy.1} parent=1 // pred_check
      _
    $region23: #{ldam_cross_entropy.1} parent=1 // pred_check_branch
      %86 = sbr.rel (0) target = $region25
    $region24: #{ldam_cross_entropy.1} parent=1 // pred_region
      %88 = dma.done [#allocation3], 16
    $region25: #{ldam_cross_entropy.1} parent=1 // pred_fallthru
      _
    %89 = vsyncpa [#allocation3], 1

</llo_original>
